<compile_context>
chip_gen: v7x
topology: tpu7x:2x2x1
jax: 0.10.0
libtpu: 0.0.40
codegen_flags: <defaults>
</compile_context>

<pallas_src>
import jax
import jax.numpy as jnp
from jax import lax
from jax.experimental import pallas as pl
from jax.experimental.pallas import tpu as pltpu

LANES = 128
SUBLANES = 8
BASE = SUBLANES * LANES          # 1024 samples = one (8,128) vreg per feature

# Packed-parameter layout inside the flat f32[64] SMEM slab.
W1_OFF = 0          # (2,5) row-major: w1[i*5 + j]
B1_OFF = 10         # (5,)
W2_OFF = 15         # (5,5) row-major: w2[k*5 + j]
B2_OFF = 40         # (5,)
W3_OFF = 45         # (5,)  (w3[k, 0])
B3_OFF = 50         # ()
PARAMS_LEN = 64     # padded length


def mlp_kernel(p_ref, x_ref, o_ref):
    """Fused MLP forward on one batch tile.

    p_ref : SMEM f32[64]           packed parameters (resident)
    x_ref : VMEM f32[2, SB, 128]   feature-major input; batch on (sublane,lane)
    o_ref : VMEM f32[SB, 128]      lane-dense output tile
    """
    # ---- Hoist all 51 parameter reads out of the chunk loop: SMEM loads and
    #      their scalar splats are issued once per grid step (Mosaic/JAX will
    #      not CSE repeated broadcasts for us).
    w1 = [[p_ref[W1_OFF + i * 5 + j] for j in range(5)] for i in range(2)]
    b1 = [p_ref[B1_OFF + j] for j in range(5)]
    w2 = [[p_ref[W2_OFF + k * 5 + j] for j in range(5)] for k in range(5)]
    b2 = [p_ref[B2_OFF + j] for j in range(5)]
    w3 = [p_ref[W3_OFF + k] for k in range(5)]
    b3 = p_ref[B3_OFF]

    sb = o_ref.shape[0]                    # static
    n_chunks = sb // SUBLANES              # static Python int

    def chunk_body(c, carry):
        s = pl.multiple_of(c * SUBLANES, SUBLANES)
        xc = x_ref[:, pl.ds(s, SUBLANES), :]     # (2, 8, 128): two vregs
        x0 = xc[0]                               # feature 0, (8, 128)
        x1 = xc[1]                               # feature 1, (8, 128)

        # ---- fc1 (2 -> 5) + ReLU : unrolled broadcast-MAC on the VPU ----
        h1 = [jnp.maximum(w1[0][j] * x0 + w1[1][j] * x1 + b1[j], 0.0)
              for j in range(5)]

        # ---- fc2 (5 -> 5) + ReLU -----------------------------------------
        h2 = []
        for j in range(5):
            acc = w2[0][j] * h1[0] + b2[j]
            for k in range(1, 5):
                acc = acc + w2[k][j] * h1[k]
            h2.append(jnp.maximum(acc, 0.0))

        # ---- fc3 (5 -> 1) ---------------------------------------------------
        y = w3[0] * h2[0] + b3
        for k in range(1, 5):
            y = y + w3[k] * h2[k]

        o_ref[pl.ds(s, SUBLANES), :] = y         # full-width lane-dense store
        return carry

    # Stream the tile one vreg chunk at a time; modest unroll for LLO
    # scheduler visibility without blowing up live ranges.
    lax.fori_loop(0, n_chunks, chunk_body, 0, unroll=min(4, n_chunks))


def pack_params(p):
    """Flatten w1,b1,w2,b2,w3,b3 into one f32[64] slab (SMEM resident)."""
    flat = jnp.concatenate([
        p["w1"].reshape(-1).astype(jnp.float32),   # 10
        p["b1"].reshape(-1).astype(jnp.float32),   # 5
        p["w2"].reshape(-1).astype(jnp.float32),   # 25
        p["b2"].reshape(-1).astype(jnp.float32),   # 5
        p["w3"].reshape(-1).astype(jnp.float32),   # 5
        p["b3"].reshape(-1).astype(jnp.float32),   # 1
    ])
    return jnp.pad(flat, (0, PARAMS_LEN - flat.shape[0]))


def _choose_tile(B, tile_batch):
    """Pick a batch tile: large to amortize per-step overhead, but no larger
    than the (1024-rounded) batch itself, and always a multiple of 1024."""
    tb = min(int(tile_batch), pl.cdiv(B, BASE) * BASE)
    tb = max(BASE, (tb // BASE) * BASE)
    return tb


def net2_forward_feature_major(xt, params, *, tile_batch=131072):
    """xt: (2, B) float32 feature-major input -> (B, 1) float32.

    Preferred entry point: producers that can emit feature-major data skip the
    extra HBM transpose pass entirely."""
    assert xt.shape[0] == 2
    B = xt.shape[1]
    tb = _choose_tile(B, tile_batch)
    B_pad = pl.cdiv(B, tb) * tb
    sb = tb // LANES                     # sublane rows per grid step
    nt = B_pad // tb                     # grid size along batch

    xs = jnp.pad(xt.astype(jnp.float32), ((0, 0), (0, B_pad - B)))
    xs = xs.reshape(2, B_pad // LANES, LANES)
    packed = pack_params(params)

    # ~90 VPU flops / sample, 12 B of HBM / sample, no transcendentals.
    cost = pl.CostEstimate(flops=90 * B_pad, transcendentals=0,
                           bytes_accessed=12 * B_pad + 4 * PARAMS_LEN)

    out2d = pl.pallas_call(
        mlp_kernel,
        out_shape=jax.ShapeDtypeStruct((B_pad // LANES, LANES), jnp.float32),
        grid=(nt,),
        in_specs=[
            # all 6 params in one tiny SMEM slab, resident across the grid
            pl.BlockSpec(memory_space=pltpu.MemorySpace.SMEM),
            # feature-major input, one batch tile per grid step
            pl.BlockSpec((2, sb, LANES), lambda i: (0, i, 0)),
        ],
        out_specs=pl.BlockSpec((sb, LANES), lambda i: (i, 0)),
        compiler_params=pltpu.CompilerParams(
            dimension_semantics=("parallel",)),   # batch axis -> 2 TCs on v7x
        cost_estimate=cost,
    )(packed, xs)

    return out2d.reshape(B_pad, 1)[:B]


def net2_forward(x, params, *, tile_batch=131072):
    """x: (B, 2) float32 -> (B, 1) float32. Matches PyTorch Net_2.forward."""
    # TODO(synk): this transpose is one extra HBM pass over the input; callers
    # that already hold feature-major (2, B) data should use
    # net2_forward_feature_major directly.
    return net2_forward_feature_major(x.astype(jnp.float32).T, params,
                                      tile_batch=tile_batch)


def init_params(key):
    """Deterministic init matching PyTorch Linear shapes (weights stored as W.T)."""
    ks = jax.random.split(key, 6)

    def uinit(k, shape, fan_in):
        bound = 1.0 / jnp.sqrt(fan_in)
        return jax.random.uniform(k, shape, jnp.float32, -bound, bound)

    return {
        "w1": uinit(ks[0], (2, 5), 2.0),   # fc1.weight.T
        "b1": uinit(ks[1], (5,), 2.0),
        "w2": uinit(ks[2], (5, 5), 5.0),   # fc2.weight.T
        "b2": uinit(ks[3], (5,), 5.0),
        "w3": uinit(ks[4], (5, 1), 5.0),   # fc3.weight.T
        "b3": uinit(ks[5], (1,), 5.0),
    }


def net2_reference(x, p):
    h1 = jnp.maximum(x @ p["w1"] + p["b1"], 0.0)
    h2 = jnp.maximum(h1 @ p["w2"] + p["b2"], 0.0)
    return h2 @ p["w3"] + p["b3"]


if __name__ == "__main__":
    key = jax.random.PRNGKey(0)
    k_x, k_x2, k_p = jax.random.split(key, 3)
    params = init_params(k_p)

    # Small test (module consumes the first 2 dataset columns -> (B, 2)).
    B = 8
    x = jax.random.normal(k_x, (B, 2), jnp.float32)
    out = jax.block_until_ready(net2_forward(x, params))
    ref = net2_reference(x, params)
    assert out.shape == (B, 1)
    assert jnp.allclose(out, ref, atol=1e-5, rtol=1e-5)

    # Larger test: exercises multiple grid steps, multiple in-kernel vreg
    # chunks, and the zero-padded batch tail.
    B2 = 5000
    x2 = jax.random.normal(k_x2, (B2, 2), jnp.float32)
    out2 = jax.block_until_ready(net2_forward(x2, params, tile_batch=2048))
    ref2 = net2_reference(x2, params)
    assert out2.shape == (B2, 1)
    assert jnp.allclose(out2, ref2, atol=1e-5, rtol=1e-5)

    print("KERNEL_OK")
</pallas_src>

<mosaic_0001>
module attributes {stable_mosaic.version = 11 : i64} {
  func.func @mlp_kernel(%arg0: i32, %arg1: memref<64xf32, #tpu.memory_space<smem>>, %arg2: memref<2x8x128xf32, #tpu.memory_space<vmem>>, %arg3: memref<8x128xf32, #tpu.memory_space<vmem>>) attributes {dimension_semantics = [#tpu.dimension_semantics<parallel>], iteration_bounds = array<i64: 1>, scalar_prefetch = 0 : i64, scratch_operands = 0 : i64, tpu.core_type = #tpu.core_type<tc>, window_params = [{transform_indices = @transform_0, window_bounds = array<i64: 64>}, {transform_indices = @transform_1, window_bounds = array<i64: 2, 8, 128>}, {transform_indices = @transform_2, window_bounds = array<i64: 8, 128>}]} {
    %c0 = arith.constant 0 : index
    %0 = memref.load %arg1[%c0] : memref<64xf32, #tpu.memory_space<smem>>
    %c1 = arith.constant 1 : index
    %1 = memref.load %arg1[%c1] : memref<64xf32, #tpu.memory_space<smem>>
    %c2 = arith.constant 2 : index
    %2 = memref.load %arg1[%c2] : memref<64xf32, #tpu.memory_space<smem>>
    %c3 = arith.constant 3 : index
    %3 = memref.load %arg1[%c3] : memref<64xf32, #tpu.memory_space<smem>>
    %c4 = arith.constant 4 : index
    %4 = memref.load %arg1[%c4] : memref<64xf32, #tpu.memory_space<smem>>
    %c5 = arith.constant 5 : index
    %5 = memref.load %arg1[%c5] : memref<64xf32, #tpu.memory_space<smem>>
    %c6 = arith.constant 6 : index
    %6 = memref.load %arg1[%c6] : memref<64xf32, #tpu.memory_space<smem>>
    %c7 = arith.constant 7 : index
    %7 = memref.load %arg1[%c7] : memref<64xf32, #tpu.memory_space<smem>>
    %c8 = arith.constant 8 : index
    %8 = memref.load %arg1[%c8] : memref<64xf32, #tpu.memory_space<smem>>
    %c9 = arith.constant 9 : index
    %9 = memref.load %arg1[%c9] : memref<64xf32, #tpu.memory_space<smem>>
    %c10 = arith.constant 10 : index
    %10 = memref.load %arg1[%c10] : memref<64xf32, #tpu.memory_space<smem>>
    %c11 = arith.constant 11 : index
    %11 = memref.load %arg1[%c11] : memref<64xf32, #tpu.memory_space<smem>>
    %c12 = arith.constant 12 : index
    %12 = memref.load %arg1[%c12] : memref<64xf32, #tpu.memory_space<smem>>
    %c13 = arith.constant 13 : index
    %13 = memref.load %arg1[%c13] : memref<64xf32, #tpu.memory_space<smem>>
    %c14 = arith.constant 14 : index
    %14 = memref.load %arg1[%c14] : memref<64xf32, #tpu.memory_space<smem>>
    %c15 = arith.constant 15 : index
    %15 = memref.load %arg1[%c15] : memref<64xf32, #tpu.memory_space<smem>>
    %c16 = arith.constant 16 : index
    %16 = memref.load %arg1[%c16] : memref<64xf32, #tpu.memory_space<smem>>
    %c17 = arith.constant 17 : index
    %17 = memref.load %arg1[%c17] : memref<64xf32, #tpu.memory_space<smem>>
    %c18 = arith.constant 18 : index
    %18 = memref.load %arg1[%c18] : memref<64xf32, #tpu.memory_space<smem>>
    %c19 = arith.constant 19 : index
    %19 = memref.load %arg1[%c19] : memref<64xf32, #tpu.memory_space<smem>>
    %c20 = arith.constant 20 : index
    %20 = memref.load %arg1[%c20] : memref<64xf32, #tpu.memory_space<smem>>
    %c21 = arith.constant 21 : index
    %21 = memref.load %arg1[%c21] : memref<64xf32, #tpu.memory_space<smem>>
    %c22 = arith.constant 22 : index
    %22 = memref.load %arg1[%c22] : memref<64xf32, #tpu.memory_space<smem>>
    %c23 = arith.constant 23 : index
    %23 = memref.load %arg1[%c23] : memref<64xf32, #tpu.memory_space<smem>>
    %c24 = arith.constant 24 : index
    %24 = memref.load %arg1[%c24] : memref<64xf32, #tpu.memory_space<smem>>
    %c25 = arith.constant 25 : index
    %25 = memref.load %arg1[%c25] : memref<64xf32, #tpu.memory_space<smem>>
    %c26 = arith.constant 26 : index
    %26 = memref.load %arg1[%c26] : memref<64xf32, #tpu.memory_space<smem>>
    %c27 = arith.constant 27 : index
    %27 = memref.load %arg1[%c27] : memref<64xf32, #tpu.memory_space<smem>>
    %c28 = arith.constant 28 : index
    %28 = memref.load %arg1[%c28] : memref<64xf32, #tpu.memory_space<smem>>
    %c29 = arith.constant 29 : index
    %29 = memref.load %arg1[%c29] : memref<64xf32, #tpu.memory_space<smem>>
    %c30 = arith.constant 30 : index
    %30 = memref.load %arg1[%c30] : memref<64xf32, #tpu.memory_space<smem>>
    %c31 = arith.constant 31 : index
    %31 = memref.load %arg1[%c31] : memref<64xf32, #tpu.memory_space<smem>>
    %c32 = arith.constant 32 : index
    %32 = memref.load %arg1[%c32] : memref<64xf32, #tpu.memory_space<smem>>
    %c33 = arith.constant 33 : index
    %33 = memref.load %arg1[%c33] : memref<64xf32, #tpu.memory_space<smem>>
    %c34 = arith.constant 34 : index
    %34 = memref.load %arg1[%c34] : memref<64xf32, #tpu.memory_space<smem>>
    %c35 = arith.constant 35 : index
    %35 = memref.load %arg1[%c35] : memref<64xf32, #tpu.memory_space<smem>>
    %c36 = arith.constant 36 : index
    %36 = memref.load %arg1[%c36] : memref<64xf32, #tpu.memory_space<smem>>
    %c37 = arith.constant 37 : index
    %37 = memref.load %arg1[%c37] : memref<64xf32, #tpu.memory_space<smem>>
    %c38 = arith.constant 38 : index
    %38 = memref.load %arg1[%c38] : memref<64xf32, #tpu.memory_space<smem>>
    %c39 = arith.constant 39 : index
    %39 = memref.load %arg1[%c39] : memref<64xf32, #tpu.memory_space<smem>>
    %c40 = arith.constant 40 : index
    %40 = memref.load %arg1[%c40] : memref<64xf32, #tpu.memory_space<smem>>
    %c41 = arith.constant 41 : index
    %41 = memref.load %arg1[%c41] : memref<64xf32, #tpu.memory_space<smem>>
    %c42 = arith.constant 42 : index
    %42 = memref.load %arg1[%c42] : memref<64xf32, #tpu.memory_space<smem>>
    %c43 = arith.constant 43 : index
    %43 = memref.load %arg1[%c43] : memref<64xf32, #tpu.memory_space<smem>>
    %c44 = arith.constant 44 : index
    %44 = memref.load %arg1[%c44] : memref<64xf32, #tpu.memory_space<smem>>
    %c45 = arith.constant 45 : index
    %45 = memref.load %arg1[%c45] : memref<64xf32, #tpu.memory_space<smem>>
    %c46 = arith.constant 46 : index
    %46 = memref.load %arg1[%c46] : memref<64xf32, #tpu.memory_space<smem>>
    %c47 = arith.constant 47 : index
    %47 = memref.load %arg1[%c47] : memref<64xf32, #tpu.memory_space<smem>>
    %c48 = arith.constant 48 : index
    %48 = memref.load %arg1[%c48] : memref<64xf32, #tpu.memory_space<smem>>
    %c49 = arith.constant 49 : index
    %49 = memref.load %arg1[%c49] : memref<64xf32, #tpu.memory_space<smem>>
    %c50 = arith.constant 50 : index
    %50 = memref.load %arg1[%c50] : memref<64xf32, #tpu.memory_space<smem>>
    %c0_i32 = arith.constant 0 : i32
    %c8_i32 = arith.constant 8 : i32
    %51 = arith.muli %c0_i32, %c8_i32 : i32
    %52 = tpu.assume_multiple %51, 8 : i32
    %c0_0 = arith.constant 0 : index
    %53 = arith.index_cast %52 : i32 to index
    %c0_1 = arith.constant 0 : index
    %54 = vector.load %arg2[%c0_0, %53, %c0_1] : memref<2x8x128xf32, #tpu.memory_space<vmem>>, vector<2x8x128xf32>
    %55 = vector.extract_strided_slice %54 {offsets = [0, 0, 0], sizes = [1, 8, 128], strides = [1, 1, 1]} : vector<2x8x128xf32> to vector<1x8x128xf32>
    %56 = vector.shape_cast %55 : vector<1x8x128xf32> to vector<8x128xf32>
    %57 = vector.extract_strided_slice %54 {offsets = [1, 0, 0], sizes = [1, 8, 128], strides = [1, 1, 1]} : vector<2x8x128xf32> to vector<1x8x128xf32>
    %58 = vector.shape_cast %57 : vector<1x8x128xf32> to vector<8x128xf32>
    %59 = vector.broadcast %0 : f32 to vector<8x128xf32>
    %60 = arith.mulf %59, %56 : vector<8x128xf32>
    %61 = vector.broadcast %5 : f32 to vector<8x128xf32>
    %62 = arith.mulf %61, %58 : vector<8x128xf32>
    %63 = arith.addf %60, %62 : vector<8x128xf32>
    %64 = vector.broadcast %10 : f32 to vector<8x128xf32>
    %65 = arith.addf %63, %64 : vector<8x128xf32>
    %cst = arith.constant 0.000000e+00 : f32
    %66 = vector.broadcast %cst : f32 to vector<8x128xf32>
    %67 = arith.maximumf %65, %66 : vector<8x128xf32>
    %68 = vector.broadcast %1 : f32 to vector<8x128xf32>
    %69 = arith.mulf %68, %56 : vector<8x128xf32>
    %70 = vector.broadcast %6 : f32 to vector<8x128xf32>
    %71 = arith.mulf %70, %58 : vector<8x128xf32>
    %72 = arith.addf %69, %71 : vector<8x128xf32>
    %73 = vector.broadcast %11 : f32 to vector<8x128xf32>
    %74 = arith.addf %72, %73 : vector<8x128xf32>
    %cst_2 = arith.constant 0.000000e+00 : f32
    %75 = vector.broadcast %cst_2 : f32 to vector<8x128xf32>
    %76 = arith.maximumf %74, %75 : vector<8x128xf32>
    %77 = vector.broadcast %2 : f32 to vector<8x128xf32>
    %78 = arith.mulf %77, %56 : vector<8x128xf32>
    %79 = vector.broadcast %7 : f32 to vector<8x128xf32>
    %80 = arith.mulf %79, %58 : vector<8x128xf32>
    %81 = arith.addf %78, %80 : vector<8x128xf32>
    %82 = vector.broadcast %12 : f32 to vector<8x128xf32>
    %83 = arith.addf %81, %82 : vector<8x128xf32>
    %cst_3 = arith.constant 0.000000e+00 : f32
    %84 = vector.broadcast %cst_3 : f32 to vector<8x128xf32>
    %85 = arith.maximumf %83, %84 : vector<8x128xf32>
    %86 = vector.broadcast %3 : f32 to vector<8x128xf32>
    %87 = arith.mulf %86, %56 : vector<8x128xf32>
    %88 = vector.broadcast %8 : f32 to vector<8x128xf32>
    %89 = arith.mulf %88, %58 : vector<8x128xf32>
    %90 = arith.addf %87, %89 : vector<8x128xf32>
    %91 = vector.broadcast %13 : f32 to vector<8x128xf32>
    %92 = arith.addf %90, %91 : vector<8x128xf32>
    %cst_4 = arith.constant 0.000000e+00 : f32
    %93 = vector.broadcast %cst_4 : f32 to vector<8x128xf32>
    %94 = arith.maximumf %92, %93 : vector<8x128xf32>
    %95 = vector.broadcast %4 : f32 to vector<8x128xf32>
    %96 = arith.mulf %95, %56 : vector<8x128xf32>
    %97 = vector.broadcast %9 : f32 to vector<8x128xf32>
    %98 = arith.mulf %97, %58 : vector<8x128xf32>
    %99 = arith.addf %96, %98 : vector<8x128xf32>
    %100 = vector.broadcast %14 : f32 to vector<8x128xf32>
    %101 = arith.addf %99, %100 : vector<8x128xf32>
    %cst_5 = arith.constant 0.000000e+00 : f32
    %102 = vector.broadcast %cst_5 : f32 to vector<8x128xf32>
    %103 = arith.maximumf %101, %102 : vector<8x128xf32>
    %104 = vector.broadcast %15 : f32 to vector<8x128xf32>
    %105 = arith.mulf %104, %67 : vector<8x128xf32>
    %106 = vector.broadcast %40 : f32 to vector<8x128xf32>
    %107 = arith.addf %105, %106 : vector<8x128xf32>
    %108 = vector.broadcast %20 : f32 to vector<8x128xf32>
    %109 = arith.mulf %108, %76 : vector<8x128xf32>
    %110 = arith.addf %107, %109 : vector<8x128xf32>
    %111 = vector.broadcast %25 : f32 to vector<8x128xf32>
    %112 = arith.mulf %111, %85 : vector<8x128xf32>
    %113 = arith.addf %110, %112 : vector<8x128xf32>
    %114 = vector.broadcast %30 : f32 to vector<8x128xf32>
    %115 = arith.mulf %114, %94 : vector<8x128xf32>
    %116 = arith.addf %113, %115 : vector<8x128xf32>
    %117 = vector.broadcast %35 : f32 to vector<8x128xf32>
    %118 = arith.mulf %117, %103 : vector<8x128xf32>
    %119 = arith.addf %116, %118 : vector<8x128xf32>
    %cst_6 = arith.constant 0.000000e+00 : f32
    %120 = vector.broadcast %cst_6 : f32 to vector<8x128xf32>
    %121 = arith.maximumf %119, %120 : vector<8x128xf32>
    %122 = vector.broadcast %16 : f32 to vector<8x128xf32>
    %123 = arith.mulf %122, %67 : vector<8x128xf32>
    %124 = vector.broadcast %41 : f32 to vector<8x128xf32>
    %125 = arith.addf %123, %124 : vector<8x128xf32>
    %126 = vector.broadcast %21 : f32 to vector<8x128xf32>
    %127 = arith.mulf %126, %76 : vector<8x128xf32>
    %128 = arith.addf %125, %127 : vector<8x128xf32>
    %129 = vector.broadcast %26 : f32 to vector<8x128xf32>
    %130 = arith.mulf %129, %85 : vector<8x128xf32>
    %131 = arith.addf %128, %130 : vector<8x128xf32>
    %132 = vector.broadcast %31 : f32 to vector<8x128xf32>
    %133 = arith.mulf %132, %94 : vector<8x128xf32>
    %134 = arith.addf %131, %133 : vector<8x128xf32>
    %135 = vector.broadcast %36 : f32 to vector<8x128xf32>
    %136 = arith.mulf %135, %103 : vector<8x128xf32>
    %137 = arith.addf %134, %136 : vector<8x128xf32>
    %cst_7 = arith.constant 0.000000e+00 : f32
    %138 = vector.broadcast %cst_7 : f32 to vector<8x128xf32>
    %139 = arith.maximumf %137, %138 : vector<8x128xf32>
    %140 = vector.broadcast %17 : f32 to vector<8x128xf32>
    %141 = arith.mulf %140, %67 : vector<8x128xf32>
    %142 = vector.broadcast %42 : f32 to vector<8x128xf32>
    %143 = arith.addf %141, %142 : vector<8x128xf32>
    %144 = vector.broadcast %22 : f32 to vector<8x128xf32>
    %145 = arith.mulf %144, %76 : vector<8x128xf32>
    %146 = arith.addf %143, %145 : vector<8x128xf32>
    %147 = vector.broadcast %27 : f32 to vector<8x128xf32>
    %148 = arith.mulf %147, %85 : vector<8x128xf32>
    %149 = arith.addf %146, %148 : vector<8x128xf32>
    %150 = vector.broadcast %32 : f32 to vector<8x128xf32>
    %151 = arith.mulf %150, %94 : vector<8x128xf32>
    %152 = arith.addf %149, %151 : vector<8x128xf32>
    %153 = vector.broadcast %37 : f32 to vector<8x128xf32>
    %154 = arith.mulf %153, %103 : vector<8x128xf32>
    %155 = arith.addf %152, %154 : vector<8x128xf32>
    %cst_8 = arith.constant 0.000000e+00 : f32
    %156 = vector.broadcast %cst_8 : f32 to vector<8x128xf32>
    %157 = arith.maximumf %155, %156 : vector<8x128xf32>
    %158 = vector.broadcast %18 : f32 to vector<8x128xf32>
    %159 = arith.mulf %158, %67 : vector<8x128xf32>
    %160 = vector.broadcast %43 : f32 to vector<8x128xf32>
    %161 = arith.addf %159, %160 : vector<8x128xf32>
    %162 = vector.broadcast %23 : f32 to vector<8x128xf32>
    %163 = arith.mulf %162, %76 : vector<8x128xf32>
    %164 = arith.addf %161, %163 : vector<8x128xf32>
    %165 = vector.broadcast %28 : f32 to vector<8x128xf32>
    %166 = arith.mulf %165, %85 : vector<8x128xf32>
    %167 = arith.addf %164, %166 : vector<8x128xf32>
    %168 = vector.broadcast %33 : f32 to vector<8x128xf32>
    %169 = arith.mulf %168, %94 : vector<8x128xf32>
    %170 = arith.addf %167, %169 : vector<8x128xf32>
    %171 = vector.broadcast %38 : f32 to vector<8x128xf32>
    %172 = arith.mulf %171, %103 : vector<8x128xf32>
    %173 = arith.addf %170, %172 : vector<8x128xf32>
    %cst_9 = arith.constant 0.000000e+00 : f32
    %174 = vector.broadcast %cst_9 : f32 to vector<8x128xf32>
    %175 = arith.maximumf %173, %174 : vector<8x128xf32>
    %176 = vector.broadcast %19 : f32 to vector<8x128xf32>
    %177 = arith.mulf %176, %67 : vector<8x128xf32>
    %178 = vector.broadcast %44 : f32 to vector<8x128xf32>
    %179 = arith.addf %177, %178 : vector<8x128xf32>
    %180 = vector.broadcast %24 : f32 to vector<8x128xf32>
    %181 = arith.mulf %180, %76 : vector<8x128xf32>
    %182 = arith.addf %179, %181 : vector<8x128xf32>
    %183 = vector.broadcast %29 : f32 to vector<8x128xf32>
    %184 = arith.mulf %183, %85 : vector<8x128xf32>
    %185 = arith.addf %182, %184 : vector<8x128xf32>
    %186 = vector.broadcast %34 : f32 to vector<8x128xf32>
    %187 = arith.mulf %186, %94 : vector<8x128xf32>
    %188 = arith.addf %185, %187 : vector<8x128xf32>
    %189 = vector.broadcast %39 : f32 to vector<8x128xf32>
    %190 = arith.mulf %189, %103 : vector<8x128xf32>
    %191 = arith.addf %188, %190 : vector<8x128xf32>
    %cst_10 = arith.constant 0.000000e+00 : f32
    %192 = vector.broadcast %cst_10 : f32 to vector<8x128xf32>
    %193 = arith.maximumf %191, %192 : vector<8x128xf32>
    %194 = vector.broadcast %45 : f32 to vector<8x128xf32>
    %195 = arith.mulf %194, %121 : vector<8x128xf32>
    %196 = vector.broadcast %50 : f32 to vector<8x128xf32>
    %197 = arith.addf %195, %196 : vector<8x128xf32>
    %198 = vector.broadcast %46 : f32 to vector<8x128xf32>
    %199 = arith.mulf %198, %139 : vector<8x128xf32>
    %200 = arith.addf %197, %199 : vector<8x128xf32>
    %201 = vector.broadcast %47 : f32 to vector<8x128xf32>
    %202 = arith.mulf %201, %157 : vector<8x128xf32>
    %203 = arith.addf %200, %202 : vector<8x128xf32>
    %204 = vector.broadcast %48 : f32 to vector<8x128xf32>
    %205 = arith.mulf %204, %175 : vector<8x128xf32>
    %206 = arith.addf %203, %205 : vector<8x128xf32>
    %207 = vector.broadcast %49 : f32 to vector<8x128xf32>
    %208 = arith.mulf %207, %193 : vector<8x128xf32>
    %209 = arith.addf %206, %208 : vector<8x128xf32>
    %210 = arith.index_cast %52 : i32 to index
    %c0_11 = arith.constant 0 : index
    %211 = vector.load %arg3[%210, %c0_11] : memref<8x128xf32, #tpu.memory_space<vmem>>, vector<8x128xf32>
    tpu.vector_store %arg3[%210, %c0_11], %209 {strides = array<i32>} : memref<8x128xf32, #tpu.memory_space<vmem>>, vector<8x128xf32>,
    %c1_i32 = arith.constant 1 : i32
    return
  }
  func.func @transform_0(%arg0: i32) -> i32 {
    %c0_i32 = arith.constant 0 : i32
    %c0_i32_0 = arith.constant 0 : i32
    return %c0_i32 : i32
  }
  func.func @transform_1(%arg0: i32) -> (i32, i32, i32) {
    %c0_i32 = arith.constant 0 : i32
    %c0_i32_0 = arith.constant 0 : i32
    %c0_i32_1 = arith.constant 0 : i32
    return %c0_i32, %arg0, %c0_i32_0 : i32, i32, i32
  }
  func.func @transform_2(%arg0: i32) -> (i32, i32) {
    %c0_i32 = arith.constant 0 : i32
    %c0_i32_0 = arith.constant 0 : i32
    return %arg0, %c0_i32 : i32, i32
  }
}

</mosaic_0001>

<llo_original>
// kernel: tpu_custom_call.1
$region0: #{tpu_custom_call.1}
  #allocation0 [shape = 'u32[]', space=smem, size = 0x4, offset = 0x4, fixed_abs, tag = 'smem constant byte address 0x4 - core index']
  #allocation1 [shape = 'u32[144,128]{1,0:T(1,128)}', space=vmem, size = 0x12000, scoped, tag = 'internal scratch']
  %s0 = inlined_call_operand.hbm [shape: f32[64], index: 0, kind: input, shape index: {}]
  %s1 = inlined_call_operand.hbm [shape: f32[2,8,128], index: 1, kind: input, shape index: {}]
  %s2 = inlined_call_operand.hbm [shape: f32[8,128], index: 2, kind: output, shape index: {}]
  %s3 = sld [smem:[#allocation0]]
  $region26: #{tpu_custom_call.1} parent=0
    _
  %s5 = ssub.s32 1, %s3
  %s6 = scalar_select 0, %s5, %s3
  $region1: #{tpu_custom_call.1} parent=0
    #allocation2 [shape = 'u8[512]{0}', space=smem, size = 0x200, scoped, tag = 'input window, operand 0, single buffered']
    #allocation3 [shape = 's32[1]{0}', space=sflag, size = 0x4, scoped, tag = 'scoped memory for tpu_custom_call.1']
    #allocation4 [shape = 's32[1]{0}', space=sflag, size = 0x4, scoped, tag = 'scoped memory for tpu_custom_call.1']
    #allocation5 [shape = 's32[1]{0}', space=sflag, size = 0x4, scoped, tag = 'scoped memory for tpu_custom_call.1']
    #allocation6 [shape = 'u8[8192]{0}', space=vmem, size = 0x2000, scoped, tag = 'input window, operand 1, single buffered']
    #allocation7 [shape = 'u8[4096]{0}', space=vmem, size = 0x1000, scoped, tag = 'output window, operand 0, single buffered']
    %7 = vsyncpa [#allocation5], 0
    %8 = vsyncpa [#allocation3], 0
    %9 = vsyncpa [#allocation4], 0
    // Predicated region
    $region2: #{tpu_custom_call.1} parent=1 // pred_check
      _
    $region3: #{tpu_custom_call.1} parent=1 // pred_check_branch
      %11 = sbr.rel (0) target = $region5
    $region4: #{tpu_custom_call.1} parent=1 // pred_region
      %s13 = ssub.s32 16, 16
      %14 = vsyncadd [#allocation5], %s13
      %17 = dma.hbm_to_smem %s0, 16, [#allocation2], [#allocation5]
    $region5: #{tpu_custom_call.1} parent=1 // pred_fallthru
      _
    // Predicated region
    $region6: #{tpu_custom_call.1} parent=1 // pred_check
      _
    $region7: #{tpu_custom_call.1} parent=1 // pred_check_branch
      %19 = sbr.rel (0) target = $region9
    $region8: #{tpu_custom_call.1} parent=1 // pred_region
      %s21 = ssub.s32 256, 256
      %22 = vsyncadd [#allocation3], %s21
      %s23 = sshll.u32 [#allocation6], 4
      %s24 = int_to_ptr.vmem [resolvable:$true] %s23
      %29 = dma.hbm_to_vmem [thread:$0]  %s1, 256, %s24, [#allocation3], 128, 128, 8
    $region9: #{tpu_custom_call.1} parent=1 // pred_fallthru
      _
    // Predicated region
    $region10: #{tpu_custom_call.1} parent=1 // pred_check
      _
    $region11: #{tpu_custom_call.1} parent=1 // pred_check_branch
      %31 = sbr.rel (0) target = $region13
    $region12: #{tpu_custom_call.1} parent=1 // pred_region
      %32 = dma.done [#allocation5], 16
    $region13: #{tpu_custom_call.1} parent=1 // pred_fallthru
      _
    // Predicated region
    $region14: #{tpu_custom_call.1} parent=1 // pred_check
      _
    $region15: #{tpu_custom_call.1} parent=1 // pred_check_branch
      %34 = sbr.rel (0) target = $region17
    $region16: #{tpu_custom_call.1} parent=1 // pred_region
      %35 = dma.done [#allocation3], 256
    $region17: #{tpu_custom_call.1} parent=1 // pred_fallthru
      _
    %36 = sfence
    %s37 = sld [smem:[#allocation2]]
    %s38 = sld [smem:[#allocation2 + $0x1]]
    %s39 = sld [smem:[#allocation2 + $0x2]]
    %s40 = sld [smem:[#allocation2 + $0x3]]
    %s41 = sld [smem:[#allocation2 + $0x4]]
    %s42 = sld [smem:[#allocation2 + $0x5]]
    %s43 = sld [smem:[#allocation2 + $0x6]]
    %s44 = sld [smem:[#allocation2 + $0x7]]
    %s45 = sld [smem:[#allocation2 + $0x8]]
    %s46 = sld [smem:[#allocation2 + $0x9]]
    %s47 = sld [smem:[#allocation2 + $0xa]]
    %s48 = sld [smem:[#allocation2 + $0xb]]
    %s49 = sld [smem:[#allocation2 + $0xc]]
    %s50 = sld [smem:[#allocation2 + $0xd]]
    %s51 = sld [smem:[#allocation2 + $0xe]]
    %s52 = sld [smem:[#allocation2 + $0xf]]
    %s53 = sld [smem:[#allocation2 + $0x10]]
    %s54 = sld [smem:[#allocation2 + $0x11]]
    %s55 = sld [smem:[#allocation2 + $0x12]]
    %s56 = sld [smem:[#allocation2 + $0x13]]
    %s57 = sld [smem:[#allocation2 + $0x14]]
    %s58 = sld [smem:[#allocation2 + $0x15]]
    %s59 = sld [smem:[#allocation2 + $0x16]]
    %s60 = sld [smem:[#allocation2 + $0x17]]
    %s61 = sld [smem:[#allocation2 + $0x18]]
    %s62 = sld [smem:[#allocation2 + $0x19]]
    %s63 = sld [smem:[#allocation2 + $0x1a]]
    %s64 = sld [smem:[#allocation2 + $0x1b]]
    %s65 = sld [smem:[#allocation2 + $0x1c]]
    %s66 = sld [smem:[#allocation2 + $0x1d]]
    %s67 = sld [smem:[#allocation2 + $0x1e]]
    %s68 = sld [smem:[#allocation2 + $0x1f]]
    %s69 = sld [smem:[#allocation2 + $0x20]]
    %s70 = sld [smem:[#allocation2 + $0x21]]
    %s71 = sld [smem:[#allocation2 + $0x22]]
    %s72 = sld [smem:[#allocation2 + $0x23]]
    %s73 = sld [smem:[#allocation2 + $0x24]]
    %s74 = sld [smem:[#allocation2 + $0x25]]
    %s75 = sld [smem:[#allocation2 + $0x26]]
    %s76 = sld [smem:[#allocation2 + $0x27]]
    %s77 = sld [smem:[#allocation2 + $0x28]]
    %s78 = sld [smem:[#allocation2 + $0x29]]
    %s79 = sld [smem:[#allocation2 + $0x2a]]
    %s80 = sld [smem:[#allocation2 + $0x2b]]
    %s81 = sld [smem:[#allocation2 + $0x2c]]
    %s82 = sld [smem:[#allocation2 + $0x2d]]
    %s83 = sld [smem:[#allocation2 + $0x2e]]
    %s84 = sld [smem:[#allocation2 + $0x2f]]
    %s85 = sld [smem:[#allocation2 + $0x30]]
    %s86 = sld [smem:[#allocation2 + $0x31]]
    %s87 = sld [smem:[#allocation2 + $0x32]]
    %v88 = vld [vmem:[#allocation6] sm:$0xff]
    %v89 = vld [vmem:[#allocation6 + $0x8] sm:$0xff]
    %v90 = vstv %s37
    %v91 = vmul.f32 %v90, %v88
    %v92 = vstv %s42
    %v93 = vmul.f32 %v92, %v89
    %v94 = vadd.f32 %v91, %v93
    %v95 = vstv %s47
    %v96 = vadd.f32 %v94, %v95
    %v97 = vmax.f32 %v96, 0.0
    %v98 = vstv %s38
    %v99 = vmul.f32 %v98, %v88
    %v100 = vstv %s43
    %v101 = vmul.f32 %v100, %v89
    %v102 = vadd.f32 %v99, %v101
    %v103 = vstv %s48
    %v104 = vadd.f32 %v102, %v103
    %v105 = vmax.f32 %v104, 0.0
    %v106 = vstv %s39
    %v107 = vmul.f32 %v106, %v88
    %v108 = vstv %s44
    %v109 = vmul.f32 %v108, %v89
    %v110 = vadd.f32 %v107, %v109
    %v111 = vstv %s49
    %v112 = vadd.f32 %v110, %v111
    %v113 = vmax.f32 %v112, 0.0
    %v114 = vstv %s40
    %v115 = vmul.f32 %v114, %v88
    %v116 = vstv %s45
    %v117 = vmul.f32 %v116, %v89
    %v118 = vadd.f32 %v115, %v117
    %v119 = vstv %s50
    %v120 = vadd.f32 %v118, %v119
    %v121 = vmax.f32 %v120, 0.0
    %v122 = vstv %s41
    %v123 = vmul.f32 %v122, %v88
    %v124 = vstv %s46
    %v125 = vmul.f32 %v124, %v89
    %v126 = vadd.f32 %v123, %v125
    %v127 = vstv %s51
    %v128 = vadd.f32 %v126, %v127
    %v129 = vmax.f32 %v128, 0.0
    %v130 = vstv %s52
    %v131 = vmul.f32 %v130, %v97
    %v132 = vstv %s77
    %v133 = vadd.f32 %v131, %v132
    %v134 = vstv %s57
    %v135 = vmul.f32 %v134, %v105
    %v136 = vadd.f32 %v133, %v135
    %v137 = vstv %s62
    %v138 = vmul.f32 %v137, %v113
    %v139 = vadd.f32 %v136, %v138
    %v140 = vstv %s67
    %v141 = vmul.f32 %v140, %v121
    %v142 = vadd.f32 %v139, %v141
    %v143 = vstv %s72
    %v144 = vmul.f32 %v143, %v129
    %v145 = vadd.f32 %v142, %v144
    %v146 = vmax.f32 %v145, 0.0
    %v147 = vstv %s53
    %v148 = vmul.f32 %v147, %v97
    %v149 = vstv %s78
    %v150 = vadd.f32 %v148, %v149
    %v151 = vstv %s58
    %v152 = vmul.f32 %v151, %v105
    %v153 = vadd.f32 %v150, %v152
    %v154 = vstv %s63
    %v155 = vmul.f32 %v154, %v113
    %v156 = vadd.f32 %v153, %v155
    %v157 = vstv %s68
    %v158 = vmul.f32 %v157, %v121
    %v159 = vadd.f32 %v156, %v158
    %v160 = vstv %s73
    %v161 = vmul.f32 %v160, %v129
    %v162 = vadd.f32 %v159, %v161
    %v163 = vmax.f32 %v162, 0.0
    %v164 = vstv %s54
    %v165 = vmul.f32 %v164, %v97
    %v166 = vstv %s79
    %v167 = vadd.f32 %v165, %v166
    %v168 = vstv %s59
    %v169 = vmul.f32 %v168, %v105
    %v170 = vadd.f32 %v167, %v169
    %v171 = vstv %s64
    %v172 = vmul.f32 %v171, %v113
    %v173 = vadd.f32 %v170, %v172
    %v174 = vstv %s69
    %v175 = vmul.f32 %v174, %v121
    %v176 = vadd.f32 %v173, %v175
    %v177 = vstv %s74
    %v178 = vmul.f32 %v177, %v129
    %v179 = vadd.f32 %v176, %v178
    %v180 = vmax.f32 %v179, 0.0
    %v181 = vstv %s55
    %v182 = vmul.f32 %v181, %v97
    %v183 = vstv %s80
    %v184 = vadd.f32 %v182, %v183
    %v185 = vstv %s60
    %v186 = vmul.f32 %v185, %v105
    %v187 = vadd.f32 %v184, %v186
    %v188 = vstv %s65
    %v189 = vmul.f32 %v188, %v113
    %v190 = vadd.f32 %v187, %v189
    %v191 = vstv %s70
    %v192 = vmul.f32 %v191, %v121
    %v193 = vadd.f32 %v190, %v192
    %v194 = vstv %s75
    %v195 = vmul.f32 %v194, %v129
    %v196 = vadd.f32 %v193, %v195
    %v197 = vmax.f32 %v196, 0.0
    %v198 = vstv %s56
    %v199 = vmul.f32 %v198, %v97
    %v200 = vstv %s81
    %v201 = vadd.f32 %v199, %v200
    %v202 = vstv %s61
    %v203 = vmul.f32 %v202, %v105
    %v204 = vadd.f32 %v201, %v203
    %v205 = vstv %s66
    %v206 = vmul.f32 %v205, %v113
    %v207 = vadd.f32 %v204, %v206
    %v208 = vstv %s71
    %v209 = vmul.f32 %v208, %v121
    %v210 = vadd.f32 %v207, %v209
    %v211 = vstv %s76
    %v212 = vmul.f32 %v211, %v129
    %v213 = vadd.f32 %v210, %v212
    %v214 = vmax.f32 %v213, 0.0
    %v215 = vstv %s82
    %v216 = vmul.f32 %v215, %v146
    %v217 = vstv %s87
    %v218 = vadd.f32 %v216, %v217
    %v219 = vstv %s83
    %v220 = vmul.f32 %v219, %v163
    %v221 = vadd.f32 %v218, %v220
    %v222 = vstv %s84
    %v223 = vmul.f32 %v222, %v180
    %v224 = vadd.f32 %v221, %v223
    %v225 = vstv %s85
    %v226 = vmul.f32 %v225, %v197
    %v227 = vadd.f32 %v224, %v226
    %v228 = vstv %s86
    %v229 = vmul.f32 %v228, %v214
    %v230 = vadd.f32 %v227, %v229
    %231 = vst [vmem:[#allocation7] sm:$0xff] %v230
    // Predicated region
    $region18: #{tpu_custom_call.1} parent=1 // pred_check
      _
    $region19: #{tpu_custom_call.1} parent=1 // pred_check_branch
      %233 = sbr.rel (0) target = $region21
    $region20: #{tpu_custom_call.1} parent=1 // pred_region
      %s235 = ssub.s32 128, 128
      %236 = vsyncadd [#allocation4], %s235
      %s238 = sshll.u32 [#allocation7], 4
      %s239 = int_to_ptr.vmem [resolvable:$true] %s238
      %241 = dma.vmem_to_hbm [thread:$0]  %s239, 128, %s2, [#allocation4]
    $region21: #{tpu_custom_call.1} parent=1 // pred_fallthru
      _
    // Predicated region
    $region22: #{tpu_custom_call.1} parent=1 // pred_check
      _
    $region23: #{tpu_custom_call.1} parent=1 // pred_check_branch
      %243 = sbr.rel (0) target = $region25
    $region24: #{tpu_custom_call.1} parent=1 // pred_region
      %244 = dma.done [#allocation4], 128
    $region25: #{tpu_custom_call.1} parent=1 // pred_fallthru
      _
    %245 = vsyncpa [#allocation3], 1
    %246 = vsyncpa [#allocation4], 1
    %247 = vsyncpa [#allocation5], 1

</llo_original>
